<compile_context>
chip_gen: v5e
topology: v5e:2x2
jax: 0.10.0
libtpu: 0.0.40
codegen_flags: <defaults>
</compile_context>

<pallas_src>
import functools

import jax
import jax.numpy as jnp
from jax.experimental import pallas as pl
from jax.experimental.pallas import tpu as pltpu


def _round_up(x, m):
    return (x + m - 1) // m * m


def _ffn_kernel(x_ref, w1_ref, b1_ref, w2_ref, b2_ref, o_ref):
    # x_ref: (tm, H) tile of token rows (original dtype); w*: (H, H) in the MXU
    # dtype; b*: (1, H) f32.
    x = x_ref[...]
    # In-kernel cast of the MXU operand (no-op for the f32 path); the residual
    # below uses the *uncast* x, matching the PyTorch module.
    h = jnp.dot(x.astype(w1_ref.dtype), w1_ref[...],
                preferred_element_type=jnp.float32)
    h = jnp.maximum(h + b1_ref[...], 0.0)
    y = jnp.dot(h.astype(w2_ref.dtype), w2_ref[...],
                preferred_element_type=jnp.float32)
    y = y + b2_ref[...]
    o_ref[...] = (y + x.astype(jnp.float32)).astype(o_ref.dtype)


@functools.partial(jax.jit, static_argnames=("tm", "mxu_dtype"))
def pointwise_feedforward(x, w1, b1, w2, b2, *, tm=2048, mxu_dtype=None):
    """x: (B, L, H). w1, w2: (H_in, H_out) already transposed for right-matmul.
    b1, b2: (H,).  mxu_dtype: optional dtype (e.g. jnp.bfloat16) for the MXU
    operands; accumulation and bias/ReLU/residual stay f32.  Returns (B, L, H)
    in x.dtype."""
    B, L, H = x.shape
    out_dtype = x.dtype
    M = B * L

    x2d = x.reshape(M, H)                       # pure metadata reshape, no copy

    # Cast only the small (H, H) weights in the wrapper; the activation cast
    # happens inside the kernel.
    if mxu_dtype is not None:
        w1 = w1.astype(mxu_dtype)
        w2 = w2.astype(mxu_dtype)
    b1_2d = b1.reshape(1, H).astype(jnp.float32)
    b2_2d = b2.reshape(1, H).astype(jnp.float32)

    x_b = jnp.dtype(x2d.dtype).itemsize
    w_b = jnp.dtype(w1.dtype).itemsize
    o_b = jnp.dtype(out_dtype).itemsize

    # --- row-tile selection -------------------------------------------------
    tm_eff = min(tm, _round_up(M, 256))
    # v7x megacore: keep >= 2 grid steps when there are enough rows to split.
    if M > 512:
        tm_eff = min(tm_eff, max(256, _round_up(pl.cdiv(M, 2), 256)))
    # VMEM budget: resident (Buffered(1)) weights + double-buffered in/out
    # tiles + f32 temporaries; stay well under v7x's 64 MiB/TC.
    weights_bytes = 2 * H * H * w_b + 2 * H * 4
    per_row_bytes = 2 * H * x_b + 2 * H * o_b + 3 * H * 4
    budget = 40 * 1024 * 1024
    while tm_eff > 256 and weights_bytes + tm_eff * per_row_bytes > budget:
        tm_eff = max(256, _round_up(tm_eff // 2, 256))

    grid = (pl.cdiv(M, tm_eff),)

    vmem_need = weights_bytes + tm_eff * per_row_bytes
    vmem_limit = int(min(max(vmem_need * 5 // 4 + (2 << 20), 16 << 20), 48 << 20))

    cost = pl.CostEstimate(
        flops=4 * M * H * H,                    # two (M,H)x(H,H) matmuls
        transcendentals=0,
        bytes_accessed=(M * H * (x_b + o_b) + 2 * H * H * w_b + 2 * H * 4),
    )

    resident = pl.Buffered(1)                   # grid-invariant blocks: 1 buffer

    out2d = pl.pallas_call(
        _ffn_kernel,
        out_shape=jax.ShapeDtypeStruct((M, H), out_dtype),
        grid_spec=pltpu.PrefetchScalarGridSpec(
            num_scalar_prefetch=0,
            grid=grid,
            in_specs=[
                # x rows (double-buffered by default; bump to pl.Buffered(3)
                # only if the output DMA shows as exposed at large tiles).
                pl.BlockSpec((tm_eff, H), lambda i: (i, 0)),
                pl.BlockSpec((H, H), lambda i: (0, 0), pipeline_mode=resident),
                pl.BlockSpec((1, H), lambda i: (0, 0), pipeline_mode=resident),
                pl.BlockSpec((H, H), lambda i: (0, 0), pipeline_mode=resident),
                pl.BlockSpec((1, H), lambda i: (0, 0), pipeline_mode=resident),
            ],
            out_specs=pl.BlockSpec((tm_eff, H), lambda i: (i, 0)),
        ),
        compiler_params=pltpu.CompilerParams(
            dimension_semantics=("parallel",),  # shards the row loop on v7x 2-TC
            vmem_limit_bytes=vmem_limit,
        ),
        cost_estimate=cost,
    )(x2d, w1, b1_2d, w2, b2_2d)

    return out2d.reshape(B, L, H)


def reference(x, w1, b1, w2, b2):
    # Pure-JAX reference of the PyTorch forward (eval mode).
    h = jnp.maximum(jnp.einsum("blh,hk->blk", x, w1) + b1, 0.0)
    y = jnp.einsum("blh,hk->blk", h, w2) + b2
    return y + x


if __name__ == "__main__":
    B, L, H = 2, 8, 128   # batch, seq, hidden_units
    key = jax.random.PRNGKey(0)
    kx, k1, k2, k3, k4 = jax.random.split(key, 5)

    x = jax.random.normal(kx, (B, L, H), dtype=jnp.float32)

    # Conv1d weights are (out_ch, in_ch, 1); build (in, out) = W.T for right-matmul.
    w1_torch = jax.random.normal(k1, (H, H, 1), dtype=jnp.float32) * 0.05
    w2_torch = jax.random.normal(k2, (H, H, 1), dtype=jnp.float32) * 0.05
    b1 = jax.random.normal(k3, (H,), dtype=jnp.float32) * 0.05
    b2 = jax.random.normal(k4, (H,), dtype=jnp.float32) * 0.05
    w1 = jnp.transpose(w1_torch[:, :, 0])   # (H_in, H_out)
    w2 = jnp.transpose(w2_torch[:, :, 0])

    # f32 path (default) — tight tolerance vs reference.
    out = jax.block_until_ready(pointwise_feedforward(x, w1, b1, w2, b2))
    ref = reference(x, w1, b1, w2, b2)
    assert out.shape == (B, L, H)
    assert jnp.allclose(out, ref, atol=1e-4, rtol=1e-4), "f32 mismatch vs reference"

    # bf16-MXU fast path — in-kernel cast, f32 accumulate, f32 residual.
    out_bf16 = jax.block_until_ready(
        pointwise_feedforward(x, w1, b1, w2, b2, mxu_dtype=jnp.bfloat16))
    assert jnp.allclose(out_bf16, ref, atol=5e-2, rtol=5e-2), "bf16 mismatch vs reference"

    # Ragged shapes (SASRec-like hidden_units=50, odd B*L): exercises the
    # unpadded-H path (masked lane stores) and the partial last row block.
    H2 = 50
    x2 = jax.random.normal(kx, (3, 7, H2), dtype=jnp.float32)
    w1b = jax.random.normal(k1, (H2, H2), dtype=jnp.float32) * 0.05
    w2b = jax.random.normal(k2, (H2, H2), dtype=jnp.float32) * 0.05
    b1b = jax.random.normal(k3, (H2,), dtype=jnp.float32) * 0.05
    b2b = jax.random.normal(k4, (H2,), dtype=jnp.float32) * 0.05
    out2 = jax.block_until_ready(pointwise_feedforward(x2, w1b, b1b, w2b, b2b))
    ref2 = reference(x2, w1b, b1b, w2b, b2b)
    assert out2.shape == (3, 7, H2)
    assert jnp.allclose(out2, ref2, atol=1e-4, rtol=1e-4), "ragged mismatch vs reference"

    print("KERNEL_OK")
</pallas_src>

<mosaic_0001>
module attributes {stable_mosaic.version = 11 : i64} {
  func.func @_ffn_kernel(%arg0: i32, %arg1: memref<256x128xf32, #tpu.memory_space<vmem>>, %arg2: memref<128x128xf32, #tpu.memory_space<vmem>>, %arg3: memref<1x128xf32, #tpu.memory_space<vmem>>, %arg4: memref<128x128xf32, #tpu.memory_space<vmem>>, %arg5: memref<1x128xf32, #tpu.memory_space<vmem>>, %arg6: memref<256x128xf32, #tpu.memory_space<vmem>>) attributes {dimension_semantics = [#tpu.dimension_semantics<parallel>], iteration_bounds = array<i64: 1>, scalar_prefetch = 0 : i64, scratch_operands = 0 : i64, tpu.core_type = #tpu.core_type<tc>, window_params = [{transform_indices = @transform_0, window_bounds = array<i64: 256, 128>}, {pipeline_mode = #tpu.pipeline_mode<synchronous>, transform_indices = @transform_1, window_bounds = array<i64: 128, 128>}, {pipeline_mode = #tpu.pipeline_mode<synchronous>, transform_indices = @transform_2, window_bounds = array<i64: 1, 128>}, {pipeline_mode = #tpu.pipeline_mode<synchronous>, transform_indices = @transform_3, window_bounds = array<i64: 128, 128>}, {pipeline_mode = #tpu.pipeline_mode<synchronous>, transform_indices = @transform_4, window_bounds = array<i64: 1, 128>}, {transform_indices = @transform_5, window_bounds = array<i64: 256, 128>}]} {
    %c0 = arith.constant 0 : index
    %c0_0 = arith.constant 0 : index
    %0 = vector.load %arg1[%c0, %c0_0] : memref<256x128xf32, #tpu.memory_space<vmem>>, vector<256x128xf32>
    %c0_1 = arith.constant 0 : index
    %c0_2 = arith.constant 0 : index
    %1 = vector.load %arg2[%c0_1, %c0_2] : memref<128x128xf32, #tpu.memory_space<vmem>>, vector<128x128xf32>
    %cst = arith.constant dense<0.000000e+00> : vector<256x128xf32>
    %2 = tpu.matmul %0, %1, %cst {dimension_numbers = #tpu.dot_dimension_numbers<[1], [0], [0], [1], [0, 0, 1, 1], [], []>} : vector<256x128xf32>, vector<128x128xf32>, vector<256x128xf32> -> vector<256x128xf32>
    %c0_3 = arith.constant 0 : index
    %c0_4 = arith.constant 0 : index
    %3 = vector.load %arg3[%c0_3, %c0_4] : memref<1x128xf32, #tpu.memory_space<vmem>>, vector<1x128xf32>
    %4 = vector.broadcast %3 : vector<1x128xf32> to vector<256x128xf32>
    %5 = arith.addf %2, %4 : vector<256x128xf32>
    %cst_5 = arith.constant 0.000000e+00 : f32
    %6 = vector.broadcast %cst_5 : f32 to vector<256x128xf32>
    %7 = arith.maximumf %5, %6 : vector<256x128xf32>
    %c0_6 = arith.constant 0 : index
    %c0_7 = arith.constant 0 : index
    %8 = vector.load %arg4[%c0_6, %c0_7] : memref<128x128xf32, #tpu.memory_space<vmem>>, vector<128x128xf32>
    %cst_8 = arith.constant dense<0.000000e+00> : vector<256x128xf32>
    %9 = tpu.matmul %7, %8, %cst_8 {dimension_numbers = #tpu.dot_dimension_numbers<[1], [0], [0], [1], [0, 0, 1, 1], [], []>} : vector<256x128xf32>, vector<128x128xf32>, vector<256x128xf32> -> vector<256x128xf32>
    %c0_9 = arith.constant 0 : index
    %c0_10 = arith.constant 0 : index
    %10 = vector.load %arg5[%c0_9, %c0_10] : memref<1x128xf32, #tpu.memory_space<vmem>>, vector<1x128xf32>
    %11 = vector.broadcast %10 : vector<1x128xf32> to vector<256x128xf32>
    %12 = arith.addf %9, %11 : vector<256x128xf32>
    %13 = arith.addf %12, %0 : vector<256x128xf32>
    %c0_11 = arith.constant 0 : index
    %c0_12 = arith.constant 0 : index
    %14 = vector.load %arg6[%c0_11, %c0_12] : memref<256x128xf32, #tpu.memory_space<vmem>>, vector<256x128xf32>
    tpu.vector_store %arg6[%c0_11, %c0_12], %13 {strides = array<i32>} : memref<256x128xf32, #tpu.memory_space<vmem>>, vector<256x128xf32>,
    return
  }
  func.func @transform_0(%arg0: i32) -> (i32, i32) {
    %c0_i32 = arith.constant 0 : i32
    %c0_i32_0 = arith.constant 0 : i32
    return %arg0, %c0_i32 : i32, i32
  }
  func.func @transform_1(%arg0: i32) -> (i32, i32) {
    %c0_i32 = arith.constant 0 : i32
    %c0_i32_0 = arith.constant 0 : i32
    %c0_i32_1 = arith.constant 0 : i32
    return %c0_i32, %c0_i32_0 : i32, i32
  }
  func.func @transform_2(%arg0: i32) -> (i32, i32) {
    %c0_i32 = arith.constant 0 : i32
    %c0_i32_0 = arith.constant 0 : i32
    %c0_i32_1 = arith.constant 0 : i32
    return %c0_i32, %c0_i32_0 : i32, i32
  }
  func.func @transform_3(%arg0: i32) -> (i32, i32) {
    %c0_i32 = arith.constant 0 : i32
    %c0_i32_0 = arith.constant 0 : i32
    %c0_i32_1 = arith.constant 0 : i32
    return %c0_i32, %c0_i32_0 : i32, i32
  }
  func.func @transform_4(%arg0: i32) -> (i32, i32) {
    %c0_i32 = arith.constant 0 : i32
    %c0_i32_0 = arith.constant 0 : i32
    %c0_i32_1 = arith.constant 0 : i32
    return %c0_i32, %c0_i32_0 : i32, i32
  }
  func.func @transform_5(%arg0: i32) -> (i32, i32) {
    %c0_i32 = arith.constant 0 : i32
    %c0_i32_0 = arith.constant 0 : i32
    return %arg0, %c0_i32 : i32, i32
  }
}

</mosaic_0001>

<llo_original>
// kernel: pointwise_feedforward.1
$region0: #{pointwise_feedforward.1}
  #allocation0 [shape = 'u32[]', space=smem, size = 0x4, offset = 0x4, fixed_abs, tag = 'smem constant byte address 0x4 - core index']
  #allocation1 [shape = 'u32[72,128]{1,0:T(1,128)}', space=vmem, size = 0x9000, scoped, tag = 'internal scratch']
  %s0 = inlined_call_operand.hbm [shape: f32[16,128], index: 0, kind: input, shape index: {}]
  %s1 = inlined_call_operand.hbm [shape: f32[128,128], index: 1, kind: input, shape index: {}]
  %s2 = inlined_call_operand.vmem [shape: f32[1,128], index: 2, kind: input, shape index: {}]
  %s3 = inlined_call_operand.hbm [shape: f32[128,128], index: 3, kind: input, shape index: {}]
  %s4 = inlined_call_operand.vmem [shape: f32[1,128], index: 4, kind: input, shape index: {}]
  %s5 = inlined_call_operand.hbm [shape: f32[16,128], index: 5, kind: output, shape index: {}]
  %s6 = sld [smem:[#allocation0]]
  $region42: #{pointwise_feedforward.1} parent=0
    _
  %s8 = ssub.s32 1, %s6
  %s9 = scalar_select 0, %s8, %s6
  $region1: #{pointwise_feedforward.1} parent=0
    #allocation2 [shape = 'u8[131072]{0}', space=vmem, size = 0x20000, scoped, tag = 'input window, operand 0, single buffered']
    #allocation3 [shape = 's32[1]{0}', space=sflag, size = 0x4, scoped, tag = 'scoped memory for pointwise_feedforward.1']
    #allocation4 [shape = 's32[1]{0}', space=sflag, size = 0x4, scoped, tag = 'scoped memory for pointwise_feedforward.1']
    #allocation5 [shape = 'u8[65536]{0}', space=vmem, size = 0x10000, scoped, tag = 'input window, operand 1, single buffered']
    #allocation6 [shape = 's32[1]{0}', space=sflag, size = 0x4, scoped, tag = 'scoped memory for pointwise_feedforward.1']
    #allocation7 [shape = 'u8[65536]{0}', space=vmem, size = 0x10000, scoped, tag = 'input window, operand 3, single buffered']
    #allocation8 [shape = 'u8[131072]{0}', space=vmem, size = 0x20000, scoped, tag = 'output window, operand 0, single buffered']
    %10 = vsyncpa [#allocation3], 0
    %11 = vsyncpa [#allocation6], 0
    %12 = vsyncpa [#allocation4], 0
    // Predicated region
    $region2: #{pointwise_feedforward.1} parent=1 // pred_check
      _
    $region3: #{pointwise_feedforward.1} parent=1 // pred_check_branch
      %14 = sbr.rel (0) target = $region5
    $region4: #{pointwise_feedforward.1} parent=1 // pred_region
      %16 = vsyncadd [#allocation3], 3840
      %s17 = sshll.u32 %s0, 4
      %s18 = int_to_ptr.hbm [resolvable:$true] %s17
      %s19 = sshll.u32 [#allocation2], 4
      %s20 = int_to_ptr.vmem [resolvable:$true] %s19
      %25 = dma.hbm_to_vmem [thread:$0]  %s18, 256, %s20, [#allocation3], 128, 128, 8
    $region5: #{pointwise_feedforward.1} parent=1 // pred_fallthru
      _
    // Predicated region
    $region6: #{pointwise_feedforward.1} parent=1 // pred_check
      _
    $region7: #{pointwise_feedforward.1} parent=1 // pred_check_branch
      %27 = sbr.rel (0) target = $region9
    $region8: #{pointwise_feedforward.1} parent=1 // pred_region
      %29 = vsyncadd [#allocation6], 0
      %s30 = sshll.u32 %s1, 4
      %s31 = int_to_ptr.hbm [resolvable:$true] %s30
      %s32 = sshll.u32 [#allocation5], 4
      %s33 = int_to_ptr.vmem [resolvable:$true] %s32
      %38 = dma.hbm_to_vmem [thread:$0]  %s31, 2048, %s33, [#allocation6], 128, 128, 8
    $region9: #{pointwise_feedforward.1} parent=1 // pred_fallthru
      _
    // Predicated region
    $region10: #{pointwise_feedforward.1} parent=1 // pred_check
      _
    $region11: #{pointwise_feedforward.1} parent=1 // pred_check_branch
      %40 = sbr.rel (0) target = $region13
    $region12: #{pointwise_feedforward.1} parent=1 // pred_region
      _
    $region13: #{pointwise_feedforward.1} parent=1 // pred_fallthru
      _
    // Predicated region
    $region14: #{pointwise_feedforward.1} parent=1 // pred_check
      _
    $region15: #{pointwise_feedforward.1} parent=1 // pred_check_branch
      %42 = sbr.rel (0) target = $region17
    $region16: #{pointwise_feedforward.1} parent=1 // pred_region
      %44 = vsyncadd [#allocation6], 0
      %s45 = sshll.u32 %s3, 4
      %s46 = int_to_ptr.hbm [resolvable:$true] %s45
      %s47 = sshll.u32 [#allocation7], 4
      %s48 = int_to_ptr.vmem [resolvable:$true] %s47
      %53 = dma.hbm_to_vmem [thread:$0]  %s46, 2048, %s48, [#allocation6], 128, 128, 8
    $region17: #{pointwise_feedforward.1} parent=1 // pred_fallthru
      _
    // Predicated region
    $region18: #{pointwise_feedforward.1} parent=1 // pred_check
      _
    $region19: #{pointwise_feedforward.1} parent=1 // pred_check_branch
      %55 = sbr.rel (0) target = $region21
    $region20: #{pointwise_feedforward.1} parent=1 // pred_region
      _
    $region21: #{pointwise_feedforward.1} parent=1 // pred_fallthru
      _
    // Predicated region
    $region22: #{pointwise_feedforward.1} parent=1 // pred_check
      _
    $region23: #{pointwise_feedforward.1} parent=1 // pred_check_branch
      %57 = sbr.rel (0) target = $region25
    $region24: #{pointwise_feedforward.1} parent=1 // pred_region
      %59 = dma.done [#allocation3], 4096
    $region25: #{pointwise_feedforward.1} parent=1 // pred_fallthru
      _
    // Predicated region
    $region26: #{pointwise_feedforward.1} parent=1 // pred_check
      _
    $region27: #{pointwise_feedforward.1} parent=1 // pred_check_branch
      %61 = sbr.rel (0) target = $region29
    $region28: #{pointwise_feedforward.1} parent=1 // pred_region
      %63 = dma.done [#allocation6], 2048
    $region29: #{pointwise_feedforward.1} parent=1 // pred_fallthru
      _
    // Predicated region
    $region30: #{pointwise_feedforward.1} parent=1 // pred_check
      _
    $region31: #{pointwise_feedforward.1} parent=1 // pred_check_branch
      %65 = sbr.rel (0) target = $region33
    $region32: #{pointwise_feedforward.1} parent=1 // pred_region
      %67 = dma.done [#allocation6], 2048
    $region33: #{pointwise_feedforward.1} parent=1 // pred_fallthru
      _
    %v68 = vld [vmem:[#allocation2] sm:$0xff]
    %v69 = vld [vmem:[#allocation2 + $0x8] sm:$0xff]
    %v70 = vld [vmem:[#allocation2 + $0x10] sm:$0xff]
    %v71 = vld [vmem:[#allocation2 + $0x18] sm:$0xff]
    %v72 = vld [vmem:[#allocation2 + $0x20] sm:$0xff]
    %v73 = vld [vmem:[#allocation2 + $0x28] sm:$0xff]
    %v74 = vld [vmem:[#allocation2 + $0x30] sm:$0xff]
    %v75 = vld [vmem:[#allocation2 + $0x38] sm:$0xff]
    %v76 = vld [vmem:[#allocation2 + $0x40] sm:$0xff]
    %v77 = vld [vmem:[#allocation2 + $0x48] sm:$0xff]
    %v78 = vld [vmem:[#allocation2 + $0x50] sm:$0xff]
    %v79 = vld [vmem:[#allocation2 + $0x58] sm:$0xff]
    %v80 = vld [vmem:[#allocation2 + $0x60] sm:$0xff]
    %v81 = vld [vmem:[#allocation2 + $0x68] sm:$0xff]
    %v82 = vld [vmem:[#allocation2 + $0x70] sm:$0xff]
    %v83 = vld [vmem:[#allocation2 + $0x78] sm:$0xff]
    %v84 = vld [vmem:[#allocation2 + $0x80] sm:$0xff]
    %v85 = vld [vmem:[#allocation2 + $0x88] sm:$0xff]
    %v86 = vld [vmem:[#allocation2 + $0x90] sm:$0xff]
    %v87 = vld [vmem:[#allocation2 + $0x98] sm:$0xff]
    %v88 = vld [vmem:[#allocation2 + $0xa0] sm:$0xff]
    %v89 = vld [vmem:[#allocation2 + $0xa8] sm:$0xff]
    %v90 = vld [vmem:[#allocation2 + $0xb0] sm:$0xff]
    %v91 = vld [vmem:[#allocation2 + $0xb8] sm:$0xff]
    %v92 = vld [vmem:[#allocation2 + $0xc0] sm:$0xff]
    %v93 = vld [vmem:[#allocation2 + $0xc8] sm:$0xff]
    %v94 = vld [vmem:[#allocation2 + $0xd0] sm:$0xff]
    %v95 = vld [vmem:[#allocation2 + $0xd8] sm:$0xff]
    %v96 = vld [vmem:[#allocation2 + $0xe0] sm:$0xff]
    %v97 = vld [vmem:[#allocation2 + $0xe8] sm:$0xff]
    %v98 = vld [vmem:[#allocation2 + $0xf0] sm:$0xff]
    %v99 = vld [vmem:[#allocation2 + $0xf8] sm:$0xff]
    %v100 = vld [vmem:[#allocation5] sm:$0xff]
    %v101 = vld [vmem:[#allocation5 + $0x8] sm:$0xff]
    %v102 = vld [vmem:[#allocation5 + $0x10] sm:$0xff]
    %v103 = vld [vmem:[#allocation5 + $0x18] sm:$0xff]
    %v104 = vld [vmem:[#allocation5 + $0x20] sm:$0xff]
    %v105 = vld [vmem:[#allocation5 + $0x28] sm:$0xff]
    %v106 = vld [vmem:[#allocation5 + $0x30] sm:$0xff]
    %v107 = vld [vmem:[#allocation5 + $0x38] sm:$0xff]
    %v108 = vld [vmem:[#allocation5 + $0x40] sm:$0xff]
    %v109 = vld [vmem:[#allocation5 + $0x48] sm:$0xff]
    %v110 = vld [vmem:[#allocation5 + $0x50] sm:$0xff]
    %v111 = vld [vmem:[#allocation5 + $0x58] sm:$0xff]
    %v112 = vld [vmem:[#allocation5 + $0x60] sm:$0xff]
    %v113 = vld [vmem:[#allocation5 + $0x68] sm:$0xff]
    %v114 = vld [vmem:[#allocation5 + $0x70] sm:$0xff]
    %v115 = vld [vmem:[#allocation5 + $0x78] sm:$0xff]
    %v116 = vld [vmem:[%s2] sm:$0x1]
    %v118 = vperm.slane %v116, 0
    %120 = vmatpush.msra.mxu0 %v115
    %121 = vmatpush.msra.mxu0 %v114
    %122 = vmatpush.msra.mxu0 %v113
    %123 = vmatpush.msra.mxu0 %v112
    %124 = vmatpush.msra.mxu0 %v111
    %125 = vmatpush.msra.mxu0 %v110
    %126 = vmatpush.msra.mxu0 %v109
    %127 = vmatpush.msra.mxu0 %v108
    %128 = vmatpush.msra.mxu0 %v107
    %129 = vmatpush.msra.mxu0 %v106
    %130 = vmatpush.msra.mxu0 %v105
    %131 = vmatpush.msra.mxu0 %v104
    %132 = vmatpush.msra.mxu0 %v103
    %133 = vmatpush.msra.mxu0 %v102
    %134 = vmatpush.msra.mxu0 %v101
    %135 = vmatpush.msra.mxu0 %v100
    %136 = vmatmul.f32.gmra.mxu0 %v68
    %v137 = vpop.f32.mrf.mxu0
    %v138 = vadd.f32 %v118, %v137
    %139 = vmatmul.f32.gmra.mxu0 %v69
    %v140 = vpop.f32.mrf.mxu0
    %v141 = vadd.f32 %v118, %v140
    %142 = vmatmul.f32.gmra.mxu0 %v70
    %v143 = vpop.f32.mrf.mxu0
    %v144 = vadd.f32 %v118, %v143
    %145 = vmatmul.f32.gmra.mxu0 %v71
    %v146 = vpop.f32.mrf.mxu0
    %v147 = vadd.f32 %v118, %v146
    %148 = vmatmul.f32.gmra.mxu0 %v72
    %v149 = vpop.f32.mrf.mxu0
    %v150 = vadd.f32 %v118, %v149
    %151 = vmatmul.f32.gmra.mxu0 %v73
    %v152 = vpop.f32.mrf.mxu0
    %v153 = vadd.f32 %v118, %v152
    %154 = vmatmul.f32.gmra.mxu0 %v74
    %v155 = vpop.f32.mrf.mxu0
    %v156 = vadd.f32 %v118, %v155
    %157 = vmatmul.f32.gmra.mxu0 %v75
    %v158 = vpop.f32.mrf.mxu0
    %v159 = vadd.f32 %v118, %v158
    %160 = vmatmul.f32.gmra.mxu0 %v76
    %v161 = vpop.f32.mrf.mxu0
    %v162 = vadd.f32 %v118, %v161
    %163 = vmatmul.f32.gmra.mxu0 %v77
    %v164 = vpop.f32.mrf.mxu0
    %v165 = vadd.f32 %v118, %v164
    %166 = vmatmul.f32.gmra.mxu0 %v78
    %v167 = vpop.f32.mrf.mxu0
    %v168 = vadd.f32 %v118, %v167
    %169 = vmatmul.f32.gmra.mxu0 %v79
    %v170 = vpop.f32.mrf.mxu0
    %v171 = vadd.f32 %v118, %v170
    %172 = vmatmul.f32.gmra.mxu0 %v80
    %v173 = vpop.f32.mrf.mxu0
    %v174 = vadd.f32 %v118, %v173
    %175 = vmatmul.f32.gmra.mxu0 %v81
    %v176 = vpop.f32.mrf.mxu0
    %v177 = vadd.f32 %v118, %v176
    %178 = vmatmul.f32.gmra.mxu0 %v82
    %v179 = vpop.f32.mrf.mxu0
    %v180 = vadd.f32 %v118, %v179
    %181 = vmatmul.f32.gmra.mxu0 %v83
    %v182 = vpop.f32.mrf.mxu0
    %v183 = vadd.f32 %v118, %v182
    %184 = vmatmul.f32.gmra.mxu0 %v84
    %v185 = vpop.f32.mrf.mxu0
    %v186 = vadd.f32 %v118, %v185
    %187 = vmatmul.f32.gmra.mxu0 %v85
    %v188 = vpop.f32.mrf.mxu0
    %v189 = vadd.f32 %v118, %v188
    %190 = vmatmul.f32.gmra.mxu0 %v86
    %v191 = vpop.f32.mrf.mxu0
    %v192 = vadd.f32 %v118, %v191
    %193 = vmatmul.f32.gmra.mxu0 %v87
    %v194 = vpop.f32.mrf.mxu0
    %v195 = vadd.f32 %v118, %v194
    %196 = vmatmul.f32.gmra.mxu0 %v88
    %v197 = vpop.f32.mrf.mxu0
    %v198 = vadd.f32 %v118, %v197
    %199 = vmatmul.f32.gmra.mxu0 %v89
    %v200 = vpop.f32.mrf.mxu0
    %v201 = vadd.f32 %v118, %v200
    %202 = vmatmul.f32.gmra.mxu0 %v90
    %v203 = vpop.f32.mrf.mxu0
    %v204 = vadd.f32 %v118, %v203
    %205 = vmatmul.f32.gmra.mxu0 %v91
    %v206 = vpop.f32.mrf.mxu0
    %v207 = vadd.f32 %v118, %v206
    %208 = vmatmul.f32.gmra.mxu0 %v92
    %v209 = vpop.f32.mrf.mxu0
    %v210 = vadd.f32 %v118, %v209
    %211 = vmatmul.f32.gmra.mxu0 %v93
    %v212 = vpop.f32.mrf.mxu0
    %v213 = vadd.f32 %v118, %v212
    %214 = vmatmul.f32.gmra.mxu0 %v94
    %v215 = vpop.f32.mrf.mxu0
    %v216 = vadd.f32 %v118, %v215
    %217 = vmatmul.f32.gmra.mxu0 %v95
    %v218 = vpop.f32.mrf.mxu0
    %v219 = vadd.f32 %v118, %v218
    %220 = vmatmul.f32.gmra.mxu0 %v96
    %v221 = vpop.f32.mrf.mxu0
    %v222 = vadd.f32 %v118, %v221
    %223 = vmatmul.f32.gmra.mxu0 %v97
    %v224 = vpop.f32.mrf.mxu0
    %v225 = vadd.f32 %v118, %v224
    %226 = vmatmul.f32.gmra.mxu0 %v98
    %v227 = vpop.f32.mrf.mxu0
    %v228 = vadd.f32 %v118, %v227
    %229 = vmatmul.f32.gmra.mxu0 %v99
    %v230 = vpop.f32.mrf.mxu0
    %v231 = vadd.f32 %v118, %v230
    %232 = vdwg.mxu0
    %v233 = vmax.f32 %v138, 0.0
    %v234 = vmax.f32 %v141, 0.0
    %v235 = vmax.f32 %v144, 0.0
    %v236 = vmax.f32 %v147, 0.0
    %v237 = vmax.f32 %v150, 0.0
    %v238 = vmax.f32 %v153, 0.0
    %v239 = vmax.f32 %v156, 0.0
    %v240 = vmax.f32 %v159, 0.0
    %v241 = vmax.f32 %v162, 0.0
    %v242 = vmax.f32 %v165, 0.0
    %v243 = vmax.f32 %v168, 0.0
    %v244 = vmax.f32 %v171, 0.0
    %v245 = vmax.f32 %v174, 0.0
    %v246 = vmax.f32 %v177, 0.0
    %v247 = vmax.f32 %v180, 0.0
    %v248 = vmax.f32 %v183, 0.0
    %v249 = vmax.f32 %v186, 0.0
    %v250 = vmax.f32 %v189, 0.0
    %v251 = vmax.f32 %v192, 0.0
    %v252 = vmax.f32 %v195, 0.0
    %v253 = vmax.f32 %v198, 0.0
    %v254 = vmax.f32 %v201, 0.0
    %v255 = vmax.f32 %v204, 0.0
    %v256 = vmax.f32 %v207, 0.0
    %v257 = vmax.f32 %v210, 0.0
    %v258 = vmax.f32 %v213, 0.0
    %v259 = vmax.f32 %v216, 0.0
    %v260 = vmax.f32 %v219, 0.0
    %v261 = vmax.f32 %v222, 0.0
    %v262 = vmax.f32 %v225, 0.0
    %v263 = vmax.f32 %v228, 0.0
    %v264 = vmax.f32 %v231, 0.0
    %v265 = vld [vmem:[#allocation7] sm:$0xff]
    %v266 = vld [vmem:[#allocation7 + $0x8] sm:$0xff]
    %v267 = vld [vmem:[#allocation7 + $0x10] sm:$0xff]
    %v268 = vld [vmem:[#allocation7 + $0x18] sm:$0xff]
    %v269 = vld [vmem:[#allocation7 + $0x20] sm:$0xff]
    %v270 = vld [vmem:[#allocation7 + $0x28] sm:$0xff]
    %v271 = vld [vmem:[#allocation7 + $0x30] sm:$0xff]
    %v272 = vld [vmem:[#allocation7 + $0x38] sm:$0xff]
    %v273 = vld [vmem:[#allocation7 + $0x40] sm:$0xff]
    %v274 = vld [vmem:[#allocation7 + $0x48] sm:$0xff]
    %v275 = vld [vmem:[#allocation7 + $0x50] sm:$0xff]
    %v276 = vld [vmem:[#allocation7 + $0x58] sm:$0xff]
    %v277 = vld [vmem:[#allocation7 + $0x60] sm:$0xff]
    %v278 = vld [vmem:[#allocation7 + $0x68] sm:$0xff]
    %v279 = vld [vmem:[#allocation7 + $0x70] sm:$0xff]
    %v280 = vld [vmem:[#allocation7 + $0x78] sm:$0xff]
    %v281 = vld [vmem:[%s4] sm:$0x1]
    %v283 = vperm.slane %v281, 0
    %285 = vmatpush.msra.mxu0 %v280
    %286 = vmatpush.msra.mxu0 %v279
    %287 = vmatpush.msra.mxu0 %v278
    %288 = vmatpush.msra.mxu0 %v277
    %289 = vmatpush.msra.mxu0 %v276
    %290 = vmatpush.msra.mxu0 %v275
    %291 = vmatpush.msra.mxu0 %v274
    %292 = vmatpush.msra.mxu0 %v273
    %293 = vmatpush.msra.mxu0 %v272
    %294 = vmatpush.msra.mxu0 %v271
    %295 = vmatpush.msra.mxu0 %v270
    %296 = vmatpush.msra.mxu0 %v269
    %297 = vmatpush.msra.mxu0 %v268
    %298 = vmatpush.msra.mxu0 %v267
    %299 = vmatpush.msra.mxu0 %v266
    %300 = vmatpush.msra.mxu0 %v265
    %301 = vmatmul.f32.gmra.mxu0 %v233
    %v302 = vpop.f32.mrf.mxu0
    %v303 = vadd.f32 %v283, %v302
    %304 = vmatmul.f32.gmra.mxu0 %v234
    %v305 = vpop.f32.mrf.mxu0
    %v306 = vadd.f32 %v283, %v305
    %307 = vmatmul.f32.gmra.mxu0 %v235
    %v308 = vpop.f32.mrf.mxu0
    %v309 = vadd.f32 %v283, %v308
    %310 = vmatmul.f32.gmra.mxu0 %v236
    %v311 = vpop.f32.mrf.mxu0
    %v312 = vadd.f32 %v283, %v311
    %313 = vmatmul.f32.gmra.mxu0 %v237
    %v314 = vpop.f32.mrf.mxu0
    %v315 = vadd.f32 %v283, %v314
    %316 = vmatmul.f32.gmra.mxu0 %v238
    %v317 = vpop.f32.mrf.mxu0
    %v318 = vadd.f32 %v283, %v317
    %319 = vmatmul.f32.gmra.mxu0 %v239
    %v320 = vpop.f32.mrf.mxu0
    %v321 = vadd.f32 %v283, %v320
    %322 = vmatmul.f32.gmra.mxu0 %v240
    %v323 = vpop.f32.mrf.mxu0
    %v324 = vadd.f32 %v283, %v323
    %325 = vmatmul.f32.gmra.mxu0 %v241
    %v326 = vpop.f32.mrf.mxu0
    %v327 = vadd.f32 %v283, %v326
    %328 = vmatmul.f32.gmra.mxu0 %v242
    %v329 = vpop.f32.mrf.mxu0
    %v330 = vadd.f32 %v283, %v329
    %331 = vmatmul.f32.gmra.mxu0 %v243
    %v332 = vpop.f32.mrf.mxu0
    %v333 = vadd.f32 %v283, %v332
    %334 = vmatmul.f32.gmra.mxu0 %v244
    %v335 = vpop.f32.mrf.mxu0
    %v336 = vadd.f32 %v283, %v335
    %337 = vmatmul.f32.gmra.mxu0 %v245
    %v338 = vpop.f32.mrf.mxu0
    %v339 = vadd.f32 %v283, %v338
    %340 = vmatmul.f32.gmra.mxu0 %v246
    %v341 = vpop.f32.mrf.mxu0
    %v342 = vadd.f32 %v283, %v341
    %343 = vmatmul.f32.gmra.mxu0 %v247
    %v344 = vpop.f32.mrf.mxu0
    %v345 = vadd.f32 %v283, %v344
    %346 = vmatmul.f32.gmra.mxu0 %v248
    %v347 = vpop.f32.mrf.mxu0
    %v348 = vadd.f32 %v283, %v347
    %349 = vmatmul.f32.gmra.mxu0 %v249
    %v350 = vpop.f32.mrf.mxu0
    %v351 = vadd.f32 %v283, %v350
    %352 = vmatmul.f32.gmra.mxu0 %v250
    %v353 = vpop.f32.mrf.mxu0
    %v354 = vadd.f32 %v283, %v353
    %355 = vmatmul.f32.gmra.mxu0 %v251
    %v356 = vpop.f32.mrf.mxu0
    %v357 = vadd.f32 %v283, %v356
    %358 = vmatmul.f32.gmra.mxu0 %v252
    %v359 = vpop.f32.mrf.mxu0
    %v360 = vadd.f32 %v283, %v359
    %361 = vmatmul.f32.gmra.mxu0 %v253
    %v362 = vpop.f32.mrf.mxu0
    %v363 = vadd.f32 %v283, %v362
    %364 = vmatmul.f32.gmra.mxu0 %v254
    %v365 = vpop.f32.mrf.mxu0
    %v366 = vadd.f32 %v283, %v365
    %367 = vmatmul.f32.gmra.mxu0 %v255
    %v368 = vpop.f32.mrf.mxu0
    %v369 = vadd.f32 %v283, %v368
    %370 = vmatmul.f32.gmra.mxu0 %v256
    %v371 = vpop.f32.mrf.mxu0
    %v372 = vadd.f32 %v283, %v371
    %373 = vmatmul.f32.gmra.mxu0 %v257
    %v374 = vpop.f32.mrf.mxu0
    %v375 = vadd.f32 %v283, %v374
    %376 = vmatmul.f32.gmra.mxu0 %v258
    %v377 = vpop.f32.mrf.mxu0
    %v378 = vadd.f32 %v283, %v377
    %379 = vmatmul.f32.gmra.mxu0 %v259
    %v380 = vpop.f32.mrf.mxu0
    %v381 = vadd.f32 %v283, %v380
    %382 = vmatmul.f32.gmra.mxu0 %v260
    %v383 = vpop.f32.mrf.mxu0
    %v384 = vadd.f32 %v283, %v383
    %385 = vmatmul.f32.gmra.mxu0 %v261
    %v386 = vpop.f32.mrf.mxu0
    %v387 = vadd.f32 %v283, %v386
    %388 = vmatmul.f32.gmra.mxu0 %v262
    %v389 = vpop.f32.mrf.mxu0
    %v390 = vadd.f32 %v283, %v389
    %391 = vmatmul.f32.gmra.mxu0 %v263
    %v392 = vpop.f32.mrf.mxu0
    %v393 = vadd.f32 %v283, %v392
    %394 = vmatmul.f32.gmra.mxu0 %v264
    %v395 = vpop.f32.mrf.mxu0
    %v396 = vadd.f32 %v283, %v395
    %397 = vdwg.mxu0
    %v398 = vadd.f32 %v303, %v68
    %v399 = vadd.f32 %v306, %v69
    %v400 = vadd.f32 %v309, %v70
    %v401 = vadd.f32 %v312, %v71
    %v402 = vadd.f32 %v315, %v72
    %v403 = vadd.f32 %v318, %v73
    %v404 = vadd.f32 %v321, %v74
    %v405 = vadd.f32 %v324, %v75
    %v406 = vadd.f32 %v327, %v76
    %v407 = vadd.f32 %v330, %v77
    %v408 = vadd.f32 %v333, %v78
    %v409 = vadd.f32 %v336, %v79
    %v410 = vadd.f32 %v339, %v80
    %v411 = vadd.f32 %v342, %v81
    %v412 = vadd.f32 %v345, %v82
    %v413 = vadd.f32 %v348, %v83
    %v414 = vadd.f32 %v351, %v84
    %v415 = vadd.f32 %v354, %v85
    %v416 = vadd.f32 %v357, %v86
    %v417 = vadd.f32 %v360, %v87
    %v418 = vadd.f32 %v363, %v88
    %v419 = vadd.f32 %v366, %v89
    %v420 = vadd.f32 %v369, %v90
    %v421 = vadd.f32 %v372, %v91
    %v422 = vadd.f32 %v375, %v92
    %v423 = vadd.f32 %v378, %v93
    %v424 = vadd.f32 %v381, %v94
    %v425 = vadd.f32 %v384, %v95
    %v426 = vadd.f32 %v387, %v96
    %v427 = vadd.f32 %v390, %v97
    %v428 = vadd.f32 %v393, %v98
    %v429 = vadd.f32 %v396, %v99
    %430 = vst [vmem:[#allocation8] sm:$0xff] %v398
    %431 = vst [vmem:[#allocation8 + $0x8] sm:$0xff] %v399
    %432 = vst [vmem:[#allocation8 + $0x10] sm:$0xff] %v400
    %433 = vst [vmem:[#allocation8 + $0x18] sm:$0xff] %v401
    %434 = vst [vmem:[#allocation8 + $0x20] sm:$0xff] %v402
    %435 = vst [vmem:[#allocation8 + $0x28] sm:$0xff] %v403
    %436 = vst [vmem:[#allocation8 + $0x30] sm:$0xff] %v404
    %437 = vst [vmem:[#allocation8 + $0x38] sm:$0xff] %v405
    %438 = vst [vmem:[#allocation8 + $0x40] sm:$0xff] %v406
    %439 = vst [vmem:[#allocation8 + $0x48] sm:$0xff] %v407
    %440 = vst [vmem:[#allocation8 + $0x50] sm:$0xff] %v408
    %441 = vst [vmem:[#allocation8 + $0x58] sm:$0xff] %v409
    %442 = vst [vmem:[#allocation8 + $0x60] sm:$0xff] %v410
    %443 = vst [vmem:[#allocation8 + $0x68] sm:$0xff] %v411
    %444 = vst [vmem:[#allocation8 + $0x70] sm:$0xff] %v412
    %445 = vst [vmem:[#allocation8 + $0x78] sm:$0xff] %v413
    %446 = vst [vmem:[#allocation8 + $0x80] sm:$0xff] %v414
    %447 = vst [vmem:[#allocation8 + $0x88] sm:$0xff] %v415
    %448 = vst [vmem:[#allocation8 + $0x90] sm:$0xff] %v416
    %449 = vst [vmem:[#allocation8 + $0x98] sm:$0xff] %v417
    %450 = vst [vmem:[#allocation8 + $0xa0] sm:$0xff] %v418
    %451 = vst [vmem:[#allocation8 + $0xa8] sm:$0xff] %v419
    %452 = vst [vmem:[#allocation8 + $0xb0] sm:$0xff] %v420
    %453 = vst [vmem:[#allocation8 + $0xb8] sm:$0xff] %v421
    %454 = vst [vmem:[#allocation8 + $0xc0] sm:$0xff] %v422
    %455 = vst [vmem:[#allocation8 + $0xc8] sm:$0xff] %v423
    %456 = vst [vmem:[#allocation8 + $0xd0] sm:$0xff] %v424
    %457 = vst [vmem:[#allocation8 + $0xd8] sm:$0xff] %v425
    %458 = vst [vmem:[#allocation8 + $0xe0] sm:$0xff] %v426
    %459 = vst [vmem:[#allocation8 + $0xe8] sm:$0xff] %v427
    %460 = vst [vmem:[#allocation8 + $0xf0] sm:$0xff] %v428
    %461 = vst [vmem:[#allocation8 + $0xf8] sm:$0xff] %v429
    // Predicated region
    $region34: #{pointwise_feedforward.1} parent=1 // pred_check
      _
    $region35: #{pointwise_feedforward.1} parent=1 // pred_check_branch
      %463 = sbr.rel (0) target = $region37
    $region36: #{pointwise_feedforward.1} parent=1 // pred_region
      %465 = vsyncadd [#allocation4], 3840
      %s466 = sshll.u32 [#allocation8], 4
      %s467 = int_to_ptr.vmem [resolvable:$true] %s466
      %s468 = sshll.u32 %s5, 4
      %s469 = int_to_ptr.hbm [resolvable:$true] %s468
      %474 = dma.vmem_to_hbm [thread:$0]  %s467, 256, %s469, [#allocation4], 128, 128, 8
    $region37: #{pointwise_feedforward.1} parent=1 // pred_fallthru
      _
    // Predicated region
    $region38: #{pointwise_feedforward.1} parent=1 // pred_check
      _
    $region39: #{pointwise_feedforward.1} parent=1 // pred_check_branch
      %476 = sbr.rel (0) target = $region41
    $region40: #{pointwise_feedforward.1} parent=1 // pred_region
      %478 = dma.done [#allocation4], 4096
    $region41: #{pointwise_feedforward.1} parent=1 // pred_fallthru
      _
    %479 = vsyncpa [#allocation3], 1
    %480 = vsyncpa [#allocation6], 1
    %481 = vsyncpa [#allocation4], 1

</llo_original>
